<compile_context>
chip_gen: v7x
topology: tpu7x:2x2x1
jax: 0.10.0
libtpu: 0.0.40
codegen_flags: <defaults>
</compile_context>

<pallas_src>
import jax
import jax.numpy as jnp
import numpy as np
from jax.experimental import pallas as pl
from jax.experimental.pallas import tpu as pltpu


def _round_up(x: int, m: int) -> int:
    return (x + m - 1) // m * m


def _choose_tile(dim: int, granule: int, target: int) -> int:
    """Pick a tile size along one axis.

    Returns either the full `dim` (single block — always a legal block shape)
    or a multiple of `granule` no larger than `dim` (Pallas masks the partial
    last block, so no wrapper-side pad/slice is ever needed).
    """
    target = max(int(target), granule)
    if target >= dim:
        return dim
    return (target // granule) * granule


# ----------------------------------------------------------------------------
# Pallas kernel: extract_features hot path (normalize_images + flatten)
# ----------------------------------------------------------------------------
def _extract_features_kernel(obs_ref, out_ref):
    # Cast uint8 -> f32 FIRST, then multiply by the precomputed constant
    # (never integer arithmetic); cast to the output dtype only at the store.
    x = obs_ref[...].astype(jnp.float32) * jnp.float32(1.0 / 255.0)
    out_ref[...] = x.astype(out_ref.dtype)


def extract_features(obs_u8: jax.Array,
                     *,
                     out_dtype=jnp.float32,
                     vmem_budget_bytes: int = 20 << 20,
                     tile_features: int = 4096,
                     tile_rows=None) -> jax.Array:
    """BasePolicy.extract_features with FlattenExtractor + normalize_images.

    obs_u8: (B, C, H, W) uint8 image observations (SB3 / PyTorch NCHW layout).
    Returns (B, C*H*W) features in `out_dtype` (f32 default, matching SB3;
    pass bf16 when the downstream extractor consumes bf16 — that halves the
    HBM write traffic of this write-bound kernel; arithmetic stays f32).
    """
    assert obs_u8.dtype == jnp.uint8, "image observations must be uint8"
    B = int(obs_u8.shape[0])
    F = int(np.prod(obs_u8.shape[1:]))

    # Flatten is a contiguous reshape (free); everything else happens in-kernel.
    x = obs_u8.reshape(B, F)
    out_bytes = jnp.dtype(out_dtype).itemsize

    # Feature tile: large multiple of 128 -> lane-dense unmasked stores except
    # on the single ragged edge tile.  Falls back to the full F when F is small.
    tf = _choose_tile(F, 128, tile_features)

    # Row tile: multiple of 32 (uint8 sublane packing), sized so the
    # double-buffered u8-input + out tiles stay within the live-VMEM budget.
    if tile_rows is None:
        rows = vmem_budget_bytes // (2 * tf * (1 + out_bytes))
        tile_rows = max(32, (rows // 32) * 32)
    tb = _choose_tile(B, 32, tile_rows)

    grid_b = pl.cdiv(B, tb)
    grid_f = pl.cdiv(F, tf)

    # v7x has 2 TensorCores: make sure small inference batches still produce
    # >= 2 grid programs by splitting the feature axis.
    if grid_b * grid_f == 1 and F > 128:
        tf = _round_up(pl.cdiv(F, 2), 128)
        grid_f = pl.cdiv(F, tf)

    return pl.pallas_call(
        _extract_features_kernel,
        out_shape=jax.ShapeDtypeStruct((B, F), out_dtype),
        grid=(grid_b, grid_f),
        in_specs=[pl.BlockSpec((tb, tf), lambda i, j: (i, j))],
        out_specs=pl.BlockSpec((tb, tf), lambda i, j: (i, j)),
        compiler_params=pltpu.CompilerParams(
            dimension_semantics=("parallel", "parallel"),
            vmem_limit_bytes=32 << 20,
        ),
        cost_estimate=pl.CostEstimate(
            flops=B * F,
            transcendentals=0,
            bytes_accessed=B * F * (1 + out_bytes),
        ),
    )(x)


# ----------------------------------------------------------------------------
# scale_action / unscale_action
# Per the performance review these few-KiB (B, A) elementwise ops are NOT
# worth a standalone pallas_call; a single jitted FMA fuses into adjacent XLA
# ops for free.  Precompute is O(A) on low/high only.
# Note: like SB3, no guard for low == high (would produce inf/NaN).
# ----------------------------------------------------------------------------
@jax.jit
def scale_action(action, low, high):
    # [low, high] -> [-1, 1]:  a * 2/(high-low) - (2*low/(high-low) + 1)
    inv_range = 2.0 / (high - low)
    return action * inv_range - (low * inv_range + 1.0)


@jax.jit
def unscale_action(scaled_action, low, high):
    # [-1, 1] -> [low, high]:  a * (high-low)/2 + (low + (high-low)/2)
    half_range = 0.5 * (high - low)
    return scaled_action * half_range + (low + half_range)


# TODO(synk): BasePolicy.forward() / _predict() are abstract
# (NotImplementedError); predict()/save/load/init_weights are host-side
# numpy / torch bookkeeping — no numeric semantics to translate beyond the
# helpers above.

if __name__ == "__main__":
    key = jax.random.PRNGKey(0)
    k_obs, k_act, k_obs2, k_obs3 = jax.random.split(key, 4)

    # 1) Small image observation (batch=2, channels=4, spatial=16x16), uint8.
    B, C, H, W = 2, 4, 16, 16
    obs = jax.random.randint(k_obs, (B, C, H, W), 0, 256, dtype=jnp.int32).astype(
        jnp.uint8
    )

    # Deterministic Box action space: 8 dims, low=-2, high=+2.
    A = 8
    low = jnp.full((A,), -2.0, dtype=jnp.float32)
    high = jnp.full((A,), 2.0, dtype=jnp.float32)
    action = jax.random.uniform(k_act, (B, A), minval=-2.0, maxval=2.0)

    feats = extract_features(obs)
    scaled = scale_action(action, low, high)
    unscaled = unscale_action(scaled, low, high)
    jax.block_until_ready((feats, scaled, unscaled))

    feats_ref = obs.astype(jnp.float32).reshape(B, C * H * W) / 255.0
    scaled_ref = 2.0 * ((action - low) / (high - low)) - 1.0
    unscaled_ref = low + 0.5 * (scaled_ref + 1.0) * (high - low)

    assert feats.shape == (B, C * H * W) and feats.dtype == jnp.float32
    assert jnp.allclose(feats, feats_ref, atol=1e-6)
    assert jnp.allclose(scaled, scaled_ref, atol=1e-5)
    assert jnp.allclose(unscaled, unscaled_ref, atol=1e-5)

    # 2) Unaligned shapes handled in-kernel (no pad/slice): F = 231 -> edge tile.
    B2, C2, H2, W2 = 3, 3, 7, 11
    obs2 = jax.random.randint(
        k_obs2, (B2, C2, H2, W2), 0, 256, dtype=jnp.int32
    ).astype(jnp.uint8)
    feats2 = extract_features(obs2)
    jax.block_until_ready(feats2)
    feats2_ref = obs2.astype(jnp.float32).reshape(B2, C2 * H2 * W2) / 255.0
    assert feats2.shape == (B2, C2 * H2 * W2)
    assert jnp.allclose(feats2, feats2_ref, atol=1e-6)

    # 3) Multi-tile ragged grid (partial batch AND feature edge blocks).
    B3, C3, H3, W3 = 70, 2, 8, 24  # F = 384
    obs3 = jax.random.randint(
        k_obs3, (B3, C3, H3, W3), 0, 256, dtype=jnp.int32
    ).astype(jnp.uint8)
    feats3 = extract_features(obs3, tile_rows=32, tile_features=128)
    jax.block_until_ready(feats3)
    feats3_ref = obs3.astype(jnp.float32).reshape(B3, C3 * H3 * W3) / 255.0
    assert feats3.shape == (B3, C3 * H3 * W3)
    assert jnp.allclose(feats3, feats3_ref, atol=1e-6)

    # 4) bf16 output path (recommended downstream dtype; halves write traffic).
    feats_bf16 = extract_features(obs, out_dtype=jnp.bfloat16)
    jax.block_until_ready(feats_bf16)
    assert feats_bf16.dtype == jnp.bfloat16
    assert jnp.allclose(feats_bf16.astype(jnp.float32), feats_ref, atol=1e-2)

    print("KERNEL_OK")
</pallas_src>

<mosaic_0001>
module attributes {stable_mosaic.version = 11 : i64} {
  func.func @_extract_features_kernel(%arg0: i32, %arg1: i32, %arg2: memref<2x512xi8, #tpu.memory_space<vmem>>, %arg3: memref<2x512xf32, #tpu.memory_space<vmem>>) attributes {dimension_semantics = [#tpu.dimension_semantics<parallel>, #tpu.dimension_semantics<parallel>], iteration_bounds = array<i64: 1, 2>, scalar_prefetch = 0 : i64, scratch_operands = 0 : i64, tpu.core_type = #tpu.core_type<tc>, window_params = [{transform_indices = @transform_0, window_bounds = array<i64: 2, 512>}, {transform_indices = @transform_1, window_bounds = array<i64: 2, 512>}]} {
    %c0 = arith.constant 0 : index
    %c0_0 = arith.constant 0 : index
    %0 = vector.load %arg2[%c0, %c0_0] : memref<2x512xi8, #tpu.memory_space<vmem>>, vector<2x512xi8>
    %1 = arith.uitofp %0 : vector<2x512xi8> to vector<2x512xf32>
    %cst = arith.constant 0.00392156886 : f32
    %2 = vector.broadcast %cst : f32 to vector<2x512xf32>
    %3 = arith.mulf %1, %2 : vector<2x512xf32>
    %c0_1 = arith.constant 0 : index
    %c0_2 = arith.constant 0 : index
    %4 = vector.load %arg3[%c0_1, %c0_2] : memref<2x512xf32, #tpu.memory_space<vmem>>, vector<2x512xf32>
    tpu.vector_store %arg3[%c0_1, %c0_2], %3 {strides = array<i32>} : memref<2x512xf32, #tpu.memory_space<vmem>>, vector<2x512xf32>,
    return
  }
  func.func @transform_0(%arg0: i32, %arg1: i32) -> (i32, i32) {
    %c0_i32 = arith.constant 0 : i32
    return %arg0, %arg1 : i32, i32
  }
  func.func @transform_1(%arg0: i32, %arg1: i32) -> (i32, i32) {
    %c0_i32 = arith.constant 0 : i32
    return %arg0, %arg1 : i32, i32
  }
}

</mosaic_0001>

<llo_original>
// kernel: tpu_custom_call.1
$region0: #{tpu_custom_call.1}
  #allocation0 [shape = 'u32[]', space=smem, size = 0x4, offset = 0x4, fixed_abs, tag = 'smem constant byte address 0x4 - core index']
  #allocation1 [shape = 'u32[144,128]{1,0:T(1,128)}', space=vmem, size = 0x12000, scoped, tag = 'internal scratch']
  %s0 = inlined_call_operand.hbm [shape: u8[2,1024], index: 0, kind: input, shape index: {}]
  %s1 = inlined_call_operand.hbm [shape: f32[2,1024], index: 1, kind: output, shape index: {}]
  %s2 = sld [smem:[#allocation0]]
  $region41: #{tpu_custom_call.1} parent=0
    _
  %s4 = ssub.s32 1, %s2
  %s5 = scalar_select 0, %s4, %s2
  $region1: #{tpu_custom_call.1} parent=0
    #allocation2 [shape = 'u8[4096]{0}', space=vmem, size = 0x1000, scoped, tag = 'input window, operand 0']
    #allocation3 [shape = 's32[2]{0}', space=sflag, size = 0x8, scoped, tag = 'scoped memory for tpu_custom_call.1']
    #allocation4 [shape = 's32[2]{0}', space=sflag, size = 0x8, scoped, tag = 'scoped memory for tpu_custom_call.1']
    #allocation5 [shape = 'u8[8192]{0}', space=vmem, size = 0x2000, scoped, tag = 'output window, operand 0']
    %6 = vsyncpa [#allocation3], 0
    %s7 = scalar_lea.sflag [#allocation3], 1
    %8 = vsyncpa %s7, 0
    %9 = vsyncpa [#allocation4], 0
    %s10 = scalar_lea.sflag [#allocation4], 1
    %11 = vsyncpa %s10, 0
    loop: start=0, step=1, limit=4
    $region2: #{tpu_custom_call.1} parent=1 // loop_pre_header
      _
    $region3: #{tpu_custom_call.1} parent=1 // loop_header
      %s13 = sphi 0, %s17
      %p14 = scmp.ge.s32.totalorder %s13, 4
      %s20 = sphi 0, %s32
      %s21 = sphi 0, %s28
      %s22 = sphi 0, %s20
      %s23 = sphi 0, %s21
      %s24 = sphi 0, %s22
      %s25 = sphi 0, %s23
      %s37 = sphi 0, %s39
      %s40 = sphi 0, %s37
      %s41 = sphi 0, %s40
      %s57 = sphi 0, %s41
      %s65 = sphi 0, %s67
      %s68 = sphi 0, %s65
      %s69 = sphi 0, %s68
      %s85 = sphi 0, %s69
    $region4: #{tpu_custom_call.1} parent=1 // loop_header_branch
      %16 = sbr.rel (%p14) target = $region8
    $region5: #{tpu_custom_call.1} parent=1 // loop_body
      %s18 = ssub.s32 %s13, 1
      %s19 = ssub.s32 %s13, 2
      %s26 = sadd.s32 1, %s21
      %p27 = scmp.ge.s32.totalorder %s26, 2
      %s28 = scalar_select %p27, 0, %s26
      %s29 = sadd.s32 1, %s20
      %s30 = scalar_select %p27, %s29, %s20
      %p31 = scmp.ge.s32.totalorder %s30, 1
      %s32 = scalar_select %p31, 0, %s30
      %s33 = ssub.s32 %s20, %s32
      %s34 = ssub.s32 %s21, %s28
      %s35 = sor.u32 %s33, %s34
      %p36 = scmp.eq.s32.totalorder %s35, 0
      %s38 = sadd.s32 %s37, 1
      %s39 = scalar_select %p36, %s37, %s38
      %p42 = pneg %p36
      %p43 = scmp.eq.s32.totalorder %s13, 1
      %p44 = por %p42, %p43
      %p45 = scmp.ne.s32.totalorder %s37, %s40
      %p46 = scmp.eq.s32.totalorder %s13, 0
      %p47 = por %p45, %p46
      %p48 = scmp.ne.s32.totalorder %s37, %s40
      %p49 = scmp.eq.s32.totalorder %s18, 1
      %p50 = por %p48, %p49
      %p51 = scmp.ne.s32.totalorder %s40, %s41
      %p52 = scmp.eq.s32.totalorder %s18, 0
      %p53 = por %p51, %p52
      %p54 = scmp.ne.s32.totalorder %s40, %s41
      %p55 = scmp.eq.s32.totalorder %s19, 1
      %p56 = por %p54, %p55
      %p58 = scmp.ne.s32.totalorder %s41, %s57
      %p59 = scmp.eq.s32.totalorder %s19, 0
      %p60 = por %p58, %p59
      %s61 = ssub.s32 %s20, %s32
      %s62 = ssub.s32 %s21, %s28
      %s63 = sor.u32 %s61, %s62
      %p64 = scmp.eq.s32.totalorder %s63, 0
      %s66 = sadd.s32 %s65, 1
      %s67 = scalar_select %p64, %s65, %s66
      %p70 = pneg %p64
      %p71 = scmp.eq.s32.totalorder %s13, 1
      %p72 = por %p70, %p71
      %p73 = scmp.ne.s32.totalorder %s65, %s68
      %p74 = scmp.eq.s32.totalorder %s13, 0
      %p75 = por %p73, %p74
      %p76 = scmp.ne.s32.totalorder %s65, %s68
      %p77 = scmp.eq.s32.totalorder %s18, 1
      %p78 = por %p76, %p77
      %p79 = scmp.ne.s32.totalorder %s68, %s69
      %p80 = scmp.eq.s32.totalorder %s18, 0
      %p81 = por %p79, %p80
      %p82 = scmp.ne.s32.totalorder %s68, %s69
      %p83 = scmp.eq.s32.totalorder %s19, 1
      %p84 = por %p82, %p83
      %p86 = scmp.ne.s32.totalorder %s69, %s85
      %p87 = scmp.eq.s32.totalorder %s19, 0
      %p88 = por %p86, %p87
      %p89 = scmp.le.s32.totalorder 1, %s13
      %p90 = scmp.lt.s32.totalorder %s13, 3
      %p91 = pnand %p89, %p90
      %p92 = pneg %p91
      // Predicated region
      $region9: #{tpu_custom_call.1} parent=5 // pred_check
        _
      $region10: #{tpu_custom_call.1} parent=5 // pred_check_branch
        %94 = sbr.rel (%p91) target = $region12
      $region11: #{tpu_custom_call.1} parent=5 // pred_region
        %s95 = ssub.s32 %s13, 1
      $region12: #{tpu_custom_call.1} parent=5 // pred_fallthru
        _
      %p96 = scmp.lt.s32.totalorder %s13, 2
      // Predicated region
      $region13: #{tpu_custom_call.1} parent=5 // pred_check
        %p97 = pneg %p96
      $region14: #{tpu_custom_call.1} parent=5 // pred_check_branch
        %99 = sbr.rel (%p97) target = $region16
      $region15: #{tpu_custom_call.1} parent=5 // pred_region
        // Predicated region
        $region17: #{tpu_custom_call.1} parent=15 // pred_check
          %p100 = pneg %p47
        $region18: #{tpu_custom_call.1} parent=15 // pred_check_branch
          %102 = sbr.rel (%p100) target = $region20
        $region19: #{tpu_custom_call.1} parent=15 // pred_region
          %s103 = sand.u32 %s37, 1
          %s104 = scalar_lea.sflag [#allocation3], %s103
          %s105 = sand.u32 %s37, 1
          %s106 = smul.addr %s105, 4
          %s107 = scalar_lea.vmem [#allocation2], %s106
          %s108 = smul.u32 4, %s21
          %s110 = ssub.s32 64, 64
          %111 = vsyncadd %s104, %s110
          %s112 = smul.addr %s20, 8
          %s113 = sadd.s32 %s108, %s112
          %s114 = smul.addr %s113, 16
          %s115 = scalar_lea.hbm %s0, %s114
          %s117 = sshll.u32 %s107, 4
          %s118 = int_to_ptr.vmem [resolvable:$true] %s117
          %120 = dma.hbm_to_vmem [thread:$0]  %s115, 64, %s118, %s104
        $region20: #{tpu_custom_call.1} parent=15 // pred_fallthru
          _
      $region16: #{tpu_custom_call.1} parent=5 // pred_fallthru
        _
      %p121 = scmp.le.s32.totalorder 1, %s13
      %p122 = scmp.lt.s32.totalorder %s13, 3
      %p123 = pnand %p121, %p122
      %p124 = pneg %p123
      // Predicated region
      $region21: #{tpu_custom_call.1} parent=5 // pred_check
        _
      $region22: #{tpu_custom_call.1} parent=5 // pred_check_branch
        %126 = sbr.rel (%p123) target = $region24
      $region23: #{tpu_custom_call.1} parent=5 // pred_region
        %s127 = ssub.s32 %s13, 1
        %s128 = sand.u32 %s40, 1
        %s129 = scalar_lea.sflag [#allocation3], %s128
        %s130 = sand.u32 %s40, 1
        %s131 = smul.addr %s130, 4
        %s132 = scalar_lea.vmem [#allocation2], %s131
        // Predicated region
        $region25: #{tpu_custom_call.1} parent=23 // pred_check
          %p133 = pneg %p53
        $region26: #{tpu_custom_call.1} parent=23 // pred_check_branch
          %135 = sbr.rel (%p133) target = $region28
        $region27: #{tpu_custom_call.1} parent=23 // pred_region
          %136 = dma.done %s129, 64
        $region28: #{tpu_custom_call.1} parent=23 // pred_fallthru
          _
        %s137 = sand.u32 %s40, 1
        %s138 = scalar_lea.sflag [#allocation3], %s137
        %s139 = sand.u32 %s40, 1
        %s140 = smul.addr %s139, 4
        %s141 = scalar_lea.vmem [#allocation2], %s140
        %p142 = pneg %p53
        %p143 = pneg %p50
        %p144 = pneg %p81
        %p145 = pneg %p78
        %s146 = sand.u32 %s68, 1
        %s147 = scalar_lea.sflag [#allocation4], %s146
        %s148 = sand.u32 %s68, 1
        %s149 = smul.addr %s148, 8
        %s150 = scalar_lea.vmem [#allocation5], %s149
        %s151 = smul.u32 4, %s23
        %s152 = smul.u32 4, %s23
        %v153 = vld [vmem:[%s132] sm:$0xf]
        %v154 = vunpack.c.0.s8 %v153
        %v155 = vunpack.c.1.s8 %v153
        %v156 = vand.u32 %v154, 255
        %v157 = vand.u32 %v155, 255
        %v158 = vcvt.s32.f32 %v156
        %v159 = vcvt.s32.f32 %v157
        %v160 = vmul.f32 %v158, 0.003921569
        %v161 = vmul.f32 %v159, 0.003921569
        %v165 = vunpack.c.l.s4 1983009808
        %v166 = vunpack.c.0.s8 %v165
        %v167 = vlaneseq
        %v168 = vshrl.u32 %v167, 7
        %v169 = vsub.s32 %v166, %v168
        %v170 = vrot.slane %v160, %v169
        %v172 = vunpack.c.l.s4 1983009808
        %v173 = vunpack.c.0.s8 %v172
        %v174 = vlaneseq
        %v175 = vshrl.u32 %v174, 7
        %v176 = vsub.s32 %v173, %v175
        %v177 = vrot.slane %v161, %v176
        %v178 = vcombine.low %v170, %v177
        %180 = vst [vmem:[%s150] sm:$0xff] %v178
        %s181 = sand.u32 %s68, 1
        %s182 = scalar_lea.sflag [#allocation4], %s181
        %s183 = sand.u32 %s68, 1
        %s184 = smul.addr %s183, 8
        %s185 = scalar_lea.vmem [#allocation5], %s184
        // Predicated region
        $region29: #{tpu_custom_call.1} parent=23 // pred_check
          %p186 = pneg %p78
        $region30: #{tpu_custom_call.1} parent=23 // pred_check_branch
          %188 = sbr.rel (%p186) target = $region32
        $region31: #{tpu_custom_call.1} parent=23 // pred_region
          %s189 = smul.u32 4, %s23
          %s191 = ssub.s32 128, 128
          %192 = vsyncadd %s182, %s191
          %s193 = smul.addr %s22, 8
          %s194 = sadd.s32 %s189, %s193
          %s195 = smul.addr %s194, 32
          %s196 = scalar_lea.hbm %s1, %s195
          %s198 = sshll.u32 %s185, 4
          %s199 = int_to_ptr.vmem [resolvable:$true] %s198
          %201 = dma.vmem_to_hbm [thread:$0]  %s199, 128, %s196, %s182
        $region32: #{tpu_custom_call.1} parent=23 // pred_fallthru
          _
      $region24: #{tpu_custom_call.1} parent=5 // pred_fallthru
        _
      %p202 = scmp.le.s32.totalorder 2, %s13
      // Predicated region
      $region33: #{tpu_custom_call.1} parent=5 // pred_check
        %p203 = pneg %p202
      $region34: #{tpu_custom_call.1} parent=5 // pred_check_branch
        %205 = sbr.rel (%p203) target = $region36
      $region35: #{tpu_custom_call.1} parent=5 // pred_region
        %s206 = ssub.s32 %s13, 2
        // Predicated region
        $region37: #{tpu_custom_call.1} parent=35 // pred_check
          %p207 = pneg %p84
        $region38: #{tpu_custom_call.1} parent=35 // pred_check_branch
          %209 = sbr.rel (%p207) target = $region40
        $region39: #{tpu_custom_call.1} parent=35 // pred_region
          %s210 = sand.u32 %s69, 1
          %s211 = scalar_lea.sflag [#allocation4], %s210
          %s212 = sand.u32 %s69, 1
          %s213 = smul.addr %s212, 8
          %s214 = scalar_lea.vmem [#allocation5], %s213
          %215 = dma.done %s211, 128
        $region40: #{tpu_custom_call.1} parent=35 // pred_fallthru
          _
      $region36: #{tpu_custom_call.1} parent=5 // pred_fallthru
        _
    $region6: #{tpu_custom_call.1} parent=1 // loop_footer
      %s17 = sadd.s32 1, %s13
    $region7: #{tpu_custom_call.1} parent=1 // loop_footer_branch
      %12 = sbr.rel target = $region3
    $region8: #{tpu_custom_call.1} parent=1 // loop_exit
      _
    %216 = vsyncpa [#allocation3], 1
    %s217 = scalar_lea.sflag [#allocation3], 1
    %218 = vsyncpa %s217, 1
    %219 = vsyncpa [#allocation4], 1
    %s220 = scalar_lea.sflag [#allocation4], 1
    %221 = vsyncpa %s220, 1

</llo_original>
